<compile_context>
chip_gen: v5e
topology: v5e:2x2
jax: 0.10.0
libtpu: 0.0.40
codegen_flags: <defaults>
</compile_context>

<pallas_src>
import numpy as np
import jax
import jax.numpy as jnp
from jax.experimental import pallas as pl
from jax.experimental.pallas import tpu as pltpu

LANE = 128   # lane width (last dim)
SUB = 8      # sublane granularity (second-to-last dim)


def _round_up(n, m):
    return ((n + m - 1) // m) * m


def mlp_kernel(x_ref, w1t_ref, w2t_ref, o_ref):
    # x_ref  : (TB, Fp)  -- includes a ones-column that carries the hidden bias
    # w1t_ref: (Fp, Hp)  -- pre-transposed hidden weights, bias folded in as one row
    # w2t_ref: (Hp, Op)  -- pre-transposed output weights, zero-padded to lane width
    h = jnp.dot(x_ref[...], w1t_ref[...], preferred_element_type=jnp.float32)
    h = jnp.maximum(h, 0.0)  # ReLU on VPU (f32)
    o_ref[...] = jnp.dot(h, w2t_ref[...],
                         preferred_element_type=jnp.float32).astype(o_ref.dtype)


def net_forward(x, w1, b1, w2, *, block_b=128):
    """Pallas forward pass equivalent to Net.forward (ReLU MLP, no output bias)."""
    B, F = x.shape
    H = w1.shape[0]
    O = w2.shape[0]

    # Padded (lane-dense) sizes.  F gets +1 for the bias-carrying ones column.
    Fp = _round_up(F + 1, LANE)
    Hp = _round_up(H, LANE)
    Op = _round_up(O, LANE)

    # Batch tile: multiple of 8 sublanes, capped at block_b; pad B up to a whole
    # number of tiles so every grid step sees a full block.
    TB = min(block_b, _round_up(B, SUB))
    Bp = _round_up(B, TB)

    # --- host-side operand prep (one-time for static weights) -----------------
    x_aug = jnp.zeros((Bp, Fp), dtype=jnp.float32)
    x_aug = x_aug.at[:B, :F].set(x.astype(jnp.float32))
    x_aug = x_aug.at[:B, F].set(1.0)                       # ones column -> bias

    w1t = jnp.zeros((Fp, Hp), dtype=jnp.float32)
    w1t = w1t.at[:F, :H].set(w1.T.astype(jnp.float32))     # pre-transposed W1
    w1t = w1t.at[F, :H].set(b1.astype(jnp.float32))        # bias as extra row

    w2t = jnp.zeros((Hp, Op), dtype=jnp.float32)
    w2t = w2t.at[:H, :O].set(w2.T.astype(jnp.float32))     # pre-transposed W2

    grid = (Bp // TB,)

    cost = pl.CostEstimate(
        flops=2 * Bp * (Fp * Hp + Hp * Op),
        transcendentals=0,
        bytes_accessed=4 * (Bp * Fp + Fp * Hp + Hp * Op + Bp * Op),
    )

    out_padded = pl.pallas_call(
        mlp_kernel,
        out_shape=jax.ShapeDtypeStruct((Bp, Op), jnp.float32),
        grid=grid,
        in_specs=[
            pl.BlockSpec((TB, Fp), lambda i: (i, 0)),   # activations: tiled over batch
            pl.BlockSpec((Fp, Hp), lambda i: (0, 0)),   # W1^T (+bias row): resident
            pl.BlockSpec((Hp, Op), lambda i: (0, 0)),   # W2^T: resident
        ],
        out_specs=pl.BlockSpec((TB, Op), lambda i: (i, 0)),
        compiler_params=pltpu.CompilerParams(
            dimension_semantics=("parallel",),          # shard batch across TCs on v7x
        ),
        cost_estimate=cost,
    )(x_aug, w1t, w2t)

    # Slice the lane-padded / batch-padded result back to the true shape.
    return out_padded[:B, :O]


def init_params(key, n_feature, n_hidden, n_output, init_scale=1.0):
    """'balanced' initialisation from the PyTorch module, done deterministically in JAX."""
    scale = init_scale / np.sqrt(n_hidden)
    k1, k2, k3 = jax.random.split(key, 3)
    w1 = scale * jax.random.normal(k1, (n_hidden, n_feature), dtype=jnp.float32)
    b1 = scale * jax.random.normal(k2, (n_hidden,), dtype=jnp.float32)
    neuron_norms = jnp.sqrt(jnp.sum(w1 ** 2, axis=1) + b1 ** 2)          # (H,)
    signs = 2.0 * jax.random.bernoulli(k3, 0.5, (n_output, n_hidden)).astype(jnp.float32) - 1.0
    w2 = signs * neuron_norms[None, :]                                    # (O, H)
    return w1, b1, w2


if __name__ == "__main__":
    batch, n_feature, n_hidden, n_output = 8, 16, 32, 4

    key = jax.random.PRNGKey(0)
    kx, kp = jax.random.split(key)
    x = jax.random.normal(kx, (batch, n_feature), dtype=jnp.float32)
    w1, b1, w2 = init_params(kp, n_feature, n_hidden, n_output)

    out = net_forward(x, w1, b1, w2)
    out = jax.block_until_ready(out)

    # reference check in plain JAX
    ref = jnp.maximum(x @ w1.T + b1[None, :], 0.0) @ w2.T
    np.testing.assert_allclose(np.asarray(out), np.asarray(ref), rtol=1e-5, atol=1e-5)

    print("KERNEL_OK")
</pallas_src>

<mosaic_0001>
module attributes {stable_mosaic.version = 11 : i64} {
  func.func @mlp_kernel(%arg0: i32, %arg1: memref<8x128xf32, #tpu.memory_space<vmem>>, %arg2: memref<128x128xf32, #tpu.memory_space<vmem>>, %arg3: memref<128x128xf32, #tpu.memory_space<vmem>>, %arg4: memref<8x128xf32, #tpu.memory_space<vmem>>) attributes {dimension_semantics = [#tpu.dimension_semantics<parallel>], iteration_bounds = array<i64: 1>, scalar_prefetch = 0 : i64, scratch_operands = 0 : i64, tpu.core_type = #tpu.core_type<tc>, window_params = [{transform_indices = @transform_0, window_bounds = array<i64: 8, 128>}, {pipeline_mode = #tpu.pipeline_mode<synchronous>, transform_indices = @transform_1, window_bounds = array<i64: 128, 128>}, {pipeline_mode = #tpu.pipeline_mode<synchronous>, transform_indices = @transform_2, window_bounds = array<i64: 128, 128>}, {transform_indices = @transform_3, window_bounds = array<i64: 8, 128>}]} {
    %c0 = arith.constant 0 : index
    %c0_0 = arith.constant 0 : index
    %0 = vector.load %arg1[%c0, %c0_0] : memref<8x128xf32, #tpu.memory_space<vmem>>, vector<8x128xf32>
    %c0_1 = arith.constant 0 : index
    %c0_2 = arith.constant 0 : index
    %1 = vector.load %arg2[%c0_1, %c0_2] : memref<128x128xf32, #tpu.memory_space<vmem>>, vector<128x128xf32>
    %cst = arith.constant dense<0.000000e+00> : vector<8x128xf32>
    %2 = tpu.matmul %0, %1, %cst {dimension_numbers = #tpu.dot_dimension_numbers<[1], [0], [0], [1], [0, 0, 1, 1], [], []>} : vector<8x128xf32>, vector<128x128xf32>, vector<8x128xf32> -> vector<8x128xf32>
    %cst_3 = arith.constant 0.000000e+00 : f32
    %3 = vector.broadcast %cst_3 : f32 to vector<8x128xf32>
    %4 = arith.maximumf %2, %3 : vector<8x128xf32>
    %c0_4 = arith.constant 0 : index
    %c0_5 = arith.constant 0 : index
    %5 = vector.load %arg3[%c0_4, %c0_5] : memref<128x128xf32, #tpu.memory_space<vmem>>, vector<128x128xf32>
    %cst_6 = arith.constant dense<0.000000e+00> : vector<8x128xf32>
    %6 = tpu.matmul %4, %5, %cst_6 {dimension_numbers = #tpu.dot_dimension_numbers<[1], [0], [0], [1], [0, 0, 1, 1], [], []>} : vector<8x128xf32>, vector<128x128xf32>, vector<8x128xf32> -> vector<8x128xf32>
    %c0_7 = arith.constant 0 : index
    %c0_8 = arith.constant 0 : index
    %7 = vector.load %arg4[%c0_7, %c0_8] : memref<8x128xf32, #tpu.memory_space<vmem>>, vector<8x128xf32>
    tpu.vector_store %arg4[%c0_7, %c0_8], %6 {strides = array<i32>} : memref<8x128xf32, #tpu.memory_space<vmem>>, vector<8x128xf32>,
    return
  }
  func.func @transform_0(%arg0: i32) -> (i32, i32) {
    %c0_i32 = arith.constant 0 : i32
    %c0_i32_0 = arith.constant 0 : i32
    return %arg0, %c0_i32 : i32, i32
  }
  func.func @transform_1(%arg0: i32) -> (i32, i32) {
    %c0_i32 = arith.constant 0 : i32
    %c0_i32_0 = arith.constant 0 : i32
    %c0_i32_1 = arith.constant 0 : i32
    return %c0_i32, %c0_i32_0 : i32, i32
  }
  func.func @transform_2(%arg0: i32) -> (i32, i32) {
    %c0_i32 = arith.constant 0 : i32
    %c0_i32_0 = arith.constant 0 : i32
    %c0_i32_1 = arith.constant 0 : i32
    return %c0_i32, %c0_i32_0 : i32, i32
  }
  func.func @transform_3(%arg0: i32) -> (i32, i32) {
    %c0_i32 = arith.constant 0 : i32
    %c0_i32_0 = arith.constant 0 : i32
    return %arg0, %c0_i32 : i32, i32
  }
}

</mosaic_0001>

<llo_original>
// kernel: tpu_custom_call.1
$region0: #{tpu_custom_call.1}
  #allocation0 [shape = 'u32[]', space=smem, size = 0x4, offset = 0x4, fixed_abs, tag = 'smem constant byte address 0x4 - core index']
  #allocation1 [shape = 'u32[72,128]{1,0:T(1,128)}', space=vmem, size = 0x9000, scoped, tag = 'internal scratch']
  %s0 = inlined_call_operand.hbm [shape: f32[8,128], index: 0, kind: input, shape index: {}]
  %s1 = inlined_call_operand.hbm [shape: f32[128,128], index: 1, kind: input, shape index: {}]
  %s2 = inlined_call_operand.hbm [shape: f32[128,128], index: 2, kind: input, shape index: {}]
  %s3 = inlined_call_operand.hbm [shape: f32[8,128], index: 3, kind: output, shape index: {}]
  %s4 = sld [smem:[#allocation0]]
  $region34: #{tpu_custom_call.1} parent=0
    _
  %s6 = ssub.s32 1, %s4
  %s7 = scalar_select 0, %s6, %s4
  $region1: #{tpu_custom_call.1} parent=0
    #allocation2 [shape = 'u8[4096]{0}', space=vmem, size = 0x1000, scoped, tag = 'input window, operand 0, single buffered']
    #allocation3 [shape = 's32[1]{0}', space=sflag, size = 0x4, scoped, tag = 'scoped memory for tpu_custom_call.1']
    #allocation4 [shape = 's32[1]{0}', space=sflag, size = 0x4, scoped, tag = 'scoped memory for tpu_custom_call.1']
    #allocation5 [shape = 'u8[65536]{0}', space=vmem, size = 0x10000, scoped, tag = 'input window, operand 1, single buffered']
    #allocation6 [shape = 's32[1]{0}', space=sflag, size = 0x4, scoped, tag = 'scoped memory for tpu_custom_call.1']
    #allocation7 [shape = 'u8[65536]{0}', space=vmem, size = 0x10000, scoped, tag = 'input window, operand 2, single buffered']
    #allocation8 [shape = 'u8[4096]{0}', space=vmem, size = 0x1000, scoped, tag = 'output window, operand 0, single buffered']
    %8 = vsyncpa [#allocation3], 0
    %9 = vsyncpa [#allocation6], 0
    %10 = vsyncpa [#allocation4], 0
    // Predicated region
    $region2: #{tpu_custom_call.1} parent=1 // pred_check
      _
    $region3: #{tpu_custom_call.1} parent=1 // pred_check_branch
      %12 = sbr.rel (0) target = $region5
    $region4: #{tpu_custom_call.1} parent=1 // pred_region
      %14 = vsyncadd [#allocation3], 0
      %s16 = sshll.u32 %s0, 4
      %s17 = int_to_ptr.hbm [resolvable:$true] %s16
      %s18 = sshll.u32 [#allocation2], 4
      %s19 = int_to_ptr.vmem [resolvable:$true] %s18
      %21 = dma.hbm_to_vmem [thread:$0]  %s17, 128, %s19, [#allocation3]
    $region5: #{tpu_custom_call.1} parent=1 // pred_fallthru
      _
    // Predicated region
    $region6: #{tpu_custom_call.1} parent=1 // pred_check
      _
    $region7: #{tpu_custom_call.1} parent=1 // pred_check_branch
      %23 = sbr.rel (0) target = $region9
    $region8: #{tpu_custom_call.1} parent=1 // pred_region
      %25 = vsyncadd [#allocation6], 0
      %s26 = sshll.u32 %s1, 4
      %s27 = int_to_ptr.hbm [resolvable:$true] %s26
      %s28 = sshll.u32 [#allocation5], 4
      %s29 = int_to_ptr.vmem [resolvable:$true] %s28
      %34 = dma.hbm_to_vmem [thread:$0]  %s27, 2048, %s29, [#allocation6], 128, 128, 8
    $region9: #{tpu_custom_call.1} parent=1 // pred_fallthru
      _
    // Predicated region
    $region10: #{tpu_custom_call.1} parent=1 // pred_check
      _
    $region11: #{tpu_custom_call.1} parent=1 // pred_check_branch
      %36 = sbr.rel (0) target = $region13
    $region12: #{tpu_custom_call.1} parent=1 // pred_region
      %38 = vsyncadd [#allocation6], 0
      %s39 = sshll.u32 %s2, 4
      %s40 = int_to_ptr.hbm [resolvable:$true] %s39
      %s41 = sshll.u32 [#allocation7], 4
      %s42 = int_to_ptr.vmem [resolvable:$true] %s41
      %47 = dma.hbm_to_vmem [thread:$0]  %s40, 2048, %s42, [#allocation6], 128, 128, 8
    $region13: #{tpu_custom_call.1} parent=1 // pred_fallthru
      _
    // Predicated region
    $region14: #{tpu_custom_call.1} parent=1 // pred_check
      _
    $region15: #{tpu_custom_call.1} parent=1 // pred_check_branch
      %49 = sbr.rel (0) target = $region17
    $region16: #{tpu_custom_call.1} parent=1 // pred_region
      %51 = dma.done [#allocation3], 128
    $region17: #{tpu_custom_call.1} parent=1 // pred_fallthru
      _
    // Predicated region
    $region18: #{tpu_custom_call.1} parent=1 // pred_check
      _
    $region19: #{tpu_custom_call.1} parent=1 // pred_check_branch
      %53 = sbr.rel (0) target = $region21
    $region20: #{tpu_custom_call.1} parent=1 // pred_region
      %55 = dma.done [#allocation6], 2048
    $region21: #{tpu_custom_call.1} parent=1 // pred_fallthru
      _
    // Predicated region
    $region22: #{tpu_custom_call.1} parent=1 // pred_check
      _
    $region23: #{tpu_custom_call.1} parent=1 // pred_check_branch
      %57 = sbr.rel (0) target = $region25
    $region24: #{tpu_custom_call.1} parent=1 // pred_region
      %59 = dma.done [#allocation6], 2048
    $region25: #{tpu_custom_call.1} parent=1 // pred_fallthru
      _
    %v60 = vld [vmem:[#allocation2] sm:$0xff]
    %v61 = vld [vmem:[#allocation5] sm:$0xff]
    %v62 = vld [vmem:[#allocation5 + $0x8] sm:$0xff]
    %v63 = vld [vmem:[#allocation5 + $0x10] sm:$0xff]
    %v64 = vld [vmem:[#allocation5 + $0x18] sm:$0xff]
    %v65 = vld [vmem:[#allocation5 + $0x20] sm:$0xff]
    %v66 = vld [vmem:[#allocation5 + $0x28] sm:$0xff]
    %v67 = vld [vmem:[#allocation5 + $0x30] sm:$0xff]
    %v68 = vld [vmem:[#allocation5 + $0x38] sm:$0xff]
    %v69 = vld [vmem:[#allocation5 + $0x40] sm:$0xff]
    %v70 = vld [vmem:[#allocation5 + $0x48] sm:$0xff]
    %v71 = vld [vmem:[#allocation5 + $0x50] sm:$0xff]
    %v72 = vld [vmem:[#allocation5 + $0x58] sm:$0xff]
    %v73 = vld [vmem:[#allocation5 + $0x60] sm:$0xff]
    %v74 = vld [vmem:[#allocation5 + $0x68] sm:$0xff]
    %v75 = vld [vmem:[#allocation5 + $0x70] sm:$0xff]
    %v76 = vld [vmem:[#allocation5 + $0x78] sm:$0xff]
    %77 = vmatpush.msra.mxu0 %v76
    %78 = vmatpush.msra.mxu0 %v75
    %79 = vmatpush.msra.mxu0 %v74
    %80 = vmatpush.msra.mxu0 %v73
    %81 = vmatpush.msra.mxu0 %v72
    %82 = vmatpush.msra.mxu0 %v71
    %83 = vmatpush.msra.mxu0 %v70
    %84 = vmatpush.msra.mxu0 %v69
    %85 = vmatpush.msra.mxu0 %v68
    %86 = vmatpush.msra.mxu0 %v67
    %87 = vmatpush.msra.mxu0 %v66
    %88 = vmatpush.msra.mxu0 %v65
    %89 = vmatpush.msra.mxu0 %v64
    %90 = vmatpush.msra.mxu0 %v63
    %91 = vmatpush.msra.mxu0 %v62
    %92 = vmatpush.msra.mxu0 %v61
    %93 = vmatmul.f32.gmra.mxu0 %v60
    %v94 = vpop.f32.mrf.mxu0
    %v95 = vadd.f32 0.0, %v94
    %96 = vdwg.mxu0
    %v97 = vmax.f32 %v95, 0.0
    %v98 = vld [vmem:[#allocation7] sm:$0xff]
    %v99 = vld [vmem:[#allocation7 + $0x8] sm:$0xff]
    %v100 = vld [vmem:[#allocation7 + $0x10] sm:$0xff]
    %v101 = vld [vmem:[#allocation7 + $0x18] sm:$0xff]
    %v102 = vld [vmem:[#allocation7 + $0x20] sm:$0xff]
    %v103 = vld [vmem:[#allocation7 + $0x28] sm:$0xff]
    %v104 = vld [vmem:[#allocation7 + $0x30] sm:$0xff]
    %v105 = vld [vmem:[#allocation7 + $0x38] sm:$0xff]
    %v106 = vld [vmem:[#allocation7 + $0x40] sm:$0xff]
    %v107 = vld [vmem:[#allocation7 + $0x48] sm:$0xff]
    %v108 = vld [vmem:[#allocation7 + $0x50] sm:$0xff]
    %v109 = vld [vmem:[#allocation7 + $0x58] sm:$0xff]
    %v110 = vld [vmem:[#allocation7 + $0x60] sm:$0xff]
    %v111 = vld [vmem:[#allocation7 + $0x68] sm:$0xff]
    %v112 = vld [vmem:[#allocation7 + $0x70] sm:$0xff]
    %v113 = vld [vmem:[#allocation7 + $0x78] sm:$0xff]
    %114 = vmatpush.msra.mxu0 %v113
    %115 = vmatpush.msra.mxu0 %v112
    %116 = vmatpush.msra.mxu0 %v111
    %117 = vmatpush.msra.mxu0 %v110
    %118 = vmatpush.msra.mxu0 %v109
    %119 = vmatpush.msra.mxu0 %v108
    %120 = vmatpush.msra.mxu0 %v107
    %121 = vmatpush.msra.mxu0 %v106
    %122 = vmatpush.msra.mxu0 %v105
    %123 = vmatpush.msra.mxu0 %v104
    %124 = vmatpush.msra.mxu0 %v103
    %125 = vmatpush.msra.mxu0 %v102
    %126 = vmatpush.msra.mxu0 %v101
    %127 = vmatpush.msra.mxu0 %v100
    %128 = vmatpush.msra.mxu0 %v99
    %129 = vmatpush.msra.mxu0 %v98
    %130 = vmatmul.f32.gmra.mxu0 %v97
    %v131 = vpop.f32.mrf.mxu0
    %v132 = vadd.f32 0.0, %v131
    %133 = vdwg.mxu0
    %134 = vst [vmem:[#allocation8] sm:$0xff] %v132
    // Predicated region
    $region26: #{tpu_custom_call.1} parent=1 // pred_check
      _
    $region27: #{tpu_custom_call.1} parent=1 // pred_check_branch
      %136 = sbr.rel (0) target = $region29
    $region28: #{tpu_custom_call.1} parent=1 // pred_region
      %138 = vsyncadd [#allocation4], 0
      %s140 = sshll.u32 [#allocation8], 4
      %s141 = int_to_ptr.vmem [resolvable:$true] %s140
      %s142 = sshll.u32 %s3, 4
      %s143 = int_to_ptr.hbm [resolvable:$true] %s142
      %145 = dma.vmem_to_hbm [thread:$0]  %s141, 128, %s143, [#allocation4]
    $region29: #{tpu_custom_call.1} parent=1 // pred_fallthru
      _
    // Predicated region
    $region30: #{tpu_custom_call.1} parent=1 // pred_check
      _
    $region31: #{tpu_custom_call.1} parent=1 // pred_check_branch
      %147 = sbr.rel (0) target = $region33
    $region32: #{tpu_custom_call.1} parent=1 // pred_region
      %149 = dma.done [#allocation4], 128
    $region33: #{tpu_custom_call.1} parent=1 // pred_fallthru
      _
    %150 = vsyncpa [#allocation3], 1
    %151 = vsyncpa [#allocation6], 1
    %152 = vsyncpa [#allocation4], 1

</llo_original>
